<compile_context>
chip_gen: v7x
topology: tpu7x:2x2x1
jax: 0.10.0
libtpu: 0.0.40
codegen_flags: <defaults>
</compile_context>

<pallas_src>
import functools

import jax
import jax.numpy as jnp
from jax import lax
from jax.experimental import pallas as pl
from jax.experimental.pallas import tpu as pltpu

_SUBLANES = 8


def _default_block_bytes():
    """Target bytes per input block: ~4 MiB, 8 MiB on parts with big VMEM."""
    try:
        vmem = pltpu.get_tpu_info().vmem_capacity_bytes
    except Exception:  # conservative fallback if the query is unavailable
        return 4 * 1024 * 1024
    return 8 * 1024 * 1024 if vmem >= 96 * 1024 * 1024 else 4 * 1024 * 1024


def _seq_acc_kernel(pred_ref, lab_ref, out_ref, *, common, row_block, batch,
                    n_full, rem_rows, need_row_mask):
    """One batch-row block: accumulate masked-equality counts into out_ref.

    pred_ref: (row_block, pred_len)   lab_ref: (row_block, label_len)
    out_ref:  (8, common) int32 — independent partial counts per grid step.
    """
    blk = pl.program_id(0)
    out_ref[...] = jnp.zeros_like(out_ref)

    def group_counts(r0, h):
        # rows [r0, r0 + h) of this block, columns [0, common).
        pred = pred_ref[pl.ds(r0, h), :common]
        lab = lab_ref[pl.ds(r0, h), :common]
        m = (pred == lab) & (lab != 0)
        if need_row_mask:
            # Mask rows past the true batch size (ragged last block reads
            # unspecified data).
            row = blk * row_block + r0 + lax.broadcasted_iota(jnp.int32, (h, 1), 0)
            m = m & (row < batch)
        return m.astype(jnp.int32)

    if n_full > 0:
        def body(g, carry):
            r0 = pl.multiple_of(g * _SUBLANES, _SUBLANES)
            out_ref[...] += group_counts(r0, _SUBLANES)
            return carry

        lax.fori_loop(0, n_full, body, 0, unroll=min(4, n_full))

    if rem_rows:  # only happens when row_block == batch (single block)
        r0 = n_full * _SUBLANES
        out_ref[:rem_rows, :] = out_ref[:rem_rows, :] + group_counts(r0, rem_rows)


def sequence_accuracy(predictions, labels, label_lengths, *, block_bytes=None):
    """Pallas-backed equivalent of SequenceAccuracy.forward (float32 result)."""
    predictions = jnp.asarray(predictions)
    labels = jnp.asarray(labels)
    label_lengths = jnp.asarray(label_lengths)

    batch, pred_len = predictions.shape
    _, label_len = labels.shape
    common = min(pred_len, label_len)

    # num_chars: trivial scalar reduce, kept off the kernel's vector path.
    # (sum(label_lengths) == 0 yields inf/nan, same as the PyTorch reference.)
    num_chars = jnp.sum(label_lengths.astype(jnp.int32)).astype(jnp.float32)
    if common == 0 or batch == 0:
        return jnp.float32(0.0) / num_chars

    # If one input is much wider than the common prefix, a one-off XLA prefix
    # slice (~3x traffic on the common columns) beats streaming dead columns.
    if pred_len > 3 * common:
        predictions, pred_len = predictions[:, :common], common
    if label_len > 3 * common:
        labels, label_len = labels[:, :common], common

    p_item = predictions.dtype.itemsize
    l_item = labels.dtype.itemsize
    per_row = max(pred_len * p_item, label_len * l_item)
    target = _default_block_bytes() if block_bytes is None else int(block_bytes)

    # Row-block sizing in bytes (dtype-independent DMA size); multiple of 8,
    # or the full batch when it is small / fits in one block.
    if batch <= _SUBLANES or batch * per_row <= target:
        row_block = batch
        if batch > _SUBLANES:
            # Split a large single block into >=2 grid steps (each >= ~1 MiB of
            # input) so a 2-TensorCore part can shard the row grid.
            min_rows = max(_SUBLANES, ((1 << 20) // per_row) // _SUBLANES * _SUBLANES)
            want_rows = -(-batch // 4)
            want_rows = -(-want_rows // _SUBLANES) * _SUBLANES
            candidate = max(min_rows, want_rows)
            if candidate < batch:
                row_block = candidate
    else:
        row_block = max(_SUBLANES, (target // per_row) // _SUBLANES * _SUBLANES)
        row_block = min(row_block, max(_SUBLANES, (batch // _SUBLANES) * _SUBLANES))

    n_blocks = -(-batch // row_block)
    need_row_mask = n_blocks * row_block != batch
    n_full, rem_rows = divmod(row_block, _SUBLANES)

    out_block_bytes = _SUBLANES * common * 4
    block_total = row_block * (pred_len * p_item + label_len * l_item) + out_block_bytes
    vmem_limit = 2 * block_total + 8 * 1024 * 1024  # double-buffering + slack

    cost = pl.CostEstimate(
        flops=4 * batch * common,
        transcendentals=0,
        bytes_accessed=batch * (pred_len * p_item + label_len * l_item)
        + n_blocks * out_block_bytes,
    )

    kernel = functools.partial(
        _seq_acc_kernel, common=common, row_block=row_block, batch=batch,
        n_full=n_full, rem_rows=rem_rows, need_row_mask=need_row_mask)

    partials = pl.pallas_call(
        kernel,
        out_shape=jax.ShapeDtypeStruct((n_blocks * _SUBLANES, common), jnp.int32),
        grid=(n_blocks,),
        in_specs=[
            pl.BlockSpec((row_block, pred_len), lambda i: (i, 0)),
            pl.BlockSpec((row_block, label_len), lambda i: (i, 0)),
        ],
        out_specs=pl.BlockSpec((_SUBLANES, common), lambda i: (i, 0)),
        compiler_params=pltpu.CompilerParams(
            dimension_semantics=("parallel",),
            vmem_limit_bytes=int(vmem_limit),
        ),
        cost_estimate=cost,
    )(predictions, labels)

    num_equal = jnp.sum(partials).astype(jnp.float32)
    return num_equal / num_chars


def _reference(predictions, labels, label_lengths):
    """Pure-JAX transcription of the PyTorch module (pad-to-max_len path)."""
    pred_len = predictions.shape[1]
    label_len = labels.shape[1]
    max_len = max(pred_len, label_len)
    p = jnp.pad(predictions, ((0, 0), (0, max_len - pred_len)))
    l = jnp.pad(labels, ((0, 0), (0, max_len - label_len)))
    num_equal = jnp.sum(((p == l) & (l != 0)).astype(jnp.int32))
    num_chars = jnp.sum(label_lengths)
    return num_equal.astype(jnp.float32) / num_chars.astype(jnp.float32)


if __name__ == "__main__":
    key = jax.random.PRNGKey(0)

    # Case 1: small shapes consistent with the module (batch=2, seqs 8 / 6).
    k1, k2, k3, key = jax.random.split(key, 4)
    B, pred_len, label_len, vocab = 2, 8, 6, 10
    preds1 = jax.random.randint(k1, (B, pred_len), 0, vocab, dtype=jnp.int32)
    labs1 = jax.random.randint(k2, (B, label_len), 0, vocab, dtype=jnp.int32)
    lens1 = jax.random.randint(k3, (B,), 1, label_len + 1, dtype=jnp.int32)
    acc1 = jax.block_until_ready(sequence_accuracy(preds1, labs1, lens1))
    assert jnp.allclose(acc1, _reference(preds1, labs1, lens1)), "case 1 mismatch"

    # Case 2: exercises the in-kernel row-group loop + remainder rows.
    k1, k2, k3, key = jax.random.split(key, 4)
    B, pred_len, label_len = 20, 40, 37
    preds2 = jax.random.randint(k1, (B, pred_len), 0, vocab, dtype=jnp.int32)
    labs2 = jax.random.randint(k2, (B, label_len), 0, vocab, dtype=jnp.int32)
    lens2 = jax.random.randint(k3, (B,), 1, label_len + 1, dtype=jnp.int32)
    acc2 = jax.block_until_ready(sequence_accuracy(preds2, labs2, lens2))
    assert jnp.allclose(acc2, _reference(preds2, labs2, lens2)), "case 2 mismatch"

    # Case 3: force tiny blocks -> multiple row blocks + ragged-row masking.
    acc3 = jax.block_until_ready(
        sequence_accuracy(preds2, labs2, lens2, block_bytes=256))
    assert jnp.allclose(acc3, _reference(preds2, labs2, lens2)), "case 3 mismatch"

    print("KERNEL_OK")
</pallas_src>

<mosaic_0001>
module attributes {stable_mosaic.version = 11 : i64} {
  func.func @_seq_acc_kernel(%arg0: i32, %arg1: memref<2x8xi32, #tpu.memory_space<vmem>>, %arg2: memref<2x6xi32, #tpu.memory_space<vmem>>, %arg3: memref<8x6xi32, #tpu.memory_space<vmem>>) attributes {dimension_semantics = [#tpu.dimension_semantics<parallel>], iteration_bounds = array<i64: 1>, scalar_prefetch = 0 : i64, scratch_operands = 0 : i64, tpu.core_type = #tpu.core_type<tc>, window_params = [{transform_indices = @transform_0, window_bounds = array<i64: 2, 8>}, {transform_indices = @transform_1, window_bounds = array<i64: 2, 6>}, {transform_indices = @transform_2, window_bounds = array<i64: 8, 6>}]} {
    %c0_i32 = arith.constant 0 : i32
    %0 = vector.broadcast %c0_i32 : i32 to vector<8x6xi32>
    %c0 = arith.constant 0 : index
    %c0_0 = arith.constant 0 : index
    %1 = vector.load %arg3[%c0, %c0_0] : memref<8x6xi32, #tpu.memory_space<vmem>>, vector<8x6xi32>
    tpu.vector_store %arg3[%c0, %c0_0], %0 {strides = array<i32>} : memref<8x6xi32, #tpu.memory_space<vmem>>, vector<8x6xi32>,
    %c0_1 = arith.constant 0 : index
    %c0_2 = arith.constant 0 : index
    %2 = vector.load %arg3[%c0_1, %c0_2] : memref<8x6xi32, #tpu.memory_space<vmem>>, vector<2x6xi32>
    %c0_3 = arith.constant 0 : index
    %c0_4 = arith.constant 0 : index
    %3 = vector.load %arg1[%c0_3, %c0_4] : memref<2x8xi32, #tpu.memory_space<vmem>>, vector<2x6xi32>
    %c0_5 = arith.constant 0 : index
    %c0_6 = arith.constant 0 : index
    %4 = vector.load %arg2[%c0_5, %c0_6] : memref<2x6xi32, #tpu.memory_space<vmem>>, vector<2x6xi32>
    %5 = arith.cmpi eq, %3, %4 : vector<2x6xi32>
    %c0_i32_7 = arith.constant 0 : i32
    %6 = vector.broadcast %c0_i32_7 : i32 to vector<2x6xi32>
    %7 = arith.cmpi ne, %4, %6 : vector<2x6xi32>
    %8 = arith.andi %5, %7 : vector<2x6xi1>
    %9 = arith.extui %8 : vector<2x6xi1> to vector<2x6xi32>
    %10 = arith.addi %2, %9 : vector<2x6xi32>
    %c0_8 = arith.constant 0 : index
    %c0_9 = arith.constant 0 : index
    %11 = vector.load %arg3[%c0_8, %c0_9] : memref<8x6xi32, #tpu.memory_space<vmem>>, vector<2x6xi32>
    tpu.vector_store %arg3[%c0_8, %c0_9], %10 {strides = array<i32>} : memref<8x6xi32, #tpu.memory_space<vmem>>, vector<2x6xi32>,
    return
  }
  func.func @transform_0(%arg0: i32) -> (i32, i32) {
    %c0_i32 = arith.constant 0 : i32
    %c0_i32_0 = arith.constant 0 : i32
    return %arg0, %c0_i32 : i32, i32
  }
  func.func @transform_1(%arg0: i32) -> (i32, i32) {
    %c0_i32 = arith.constant 0 : i32
    %c0_i32_0 = arith.constant 0 : i32
    return %arg0, %c0_i32 : i32, i32
  }
  func.func @transform_2(%arg0: i32) -> (i32, i32) {
    %c0_i32 = arith.constant 0 : i32
    %c0_i32_0 = arith.constant 0 : i32
    return %arg0, %c0_i32 : i32, i32
  }
}

</mosaic_0001>

<llo_original>
// kernel: tpu_custom_call.1
$region0: #{tpu_custom_call.1}
  #allocation0 [shape = 'u32[]', space=smem, size = 0x4, offset = 0x4, fixed_abs, tag = 'smem constant byte address 0x4 - core index']
  #allocation1 [shape = 'u32[144,128]{1,0:T(1,128)}', space=vmem, size = 0x12000, scoped, tag = 'internal scratch']
  %s0 = inlined_call_operand.hbm [shape: s32[2,8], index: 0, kind: input, shape index: {}]
  %s1 = inlined_call_operand.vmem [shape: s32[2,6], index: 1, kind: input, shape index: {}]
  %s2 = inlined_call_operand.hbm [shape: s32[8,6], index: 2, kind: output, shape index: {}]
  %s3 = sld [smem:[#allocation0]]
  $region22: #{tpu_custom_call.1} parent=0
    _
  %s5 = ssub.s32 1, %s3
  %s6 = scalar_select 0, %s5, %s3
  $region1: #{tpu_custom_call.1} parent=0
    #allocation2 [shape = 'u8[1024]{0}', space=vmem, size = 0x400, scoped, tag = 'input window, operand 0, single buffered']
    #allocation3 [shape = 's32[1]{0}', space=sflag, size = 0x4, scoped, tag = 'scoped memory for tpu_custom_call.1']
    #allocation4 [shape = 's32[1]{0}', space=sflag, size = 0x4, scoped, tag = 'scoped memory for tpu_custom_call.1']
    #allocation5 [shape = 'u8[4096]{0}', space=vmem, size = 0x1000, scoped, tag = 'output window, operand 0, single buffered']
    %7 = vsyncpa [#allocation3], 0
    %8 = vsyncpa [#allocation4], 0
    // Predicated region
    $region2: #{tpu_custom_call.1} parent=1 // pred_check
      _
    $region3: #{tpu_custom_call.1} parent=1 // pred_check_branch
      %10 = sbr.rel (0) target = $region5
    $region4: #{tpu_custom_call.1} parent=1 // pred_region
      %s12 = ssub.s32 32, 32
      %13 = vsyncadd [#allocation3], %s12
      %s15 = sshll.u32 [#allocation2], 4
      %s16 = int_to_ptr.vmem [resolvable:$true] %s15
      %18 = dma.hbm_to_vmem [thread:$0]  %s0, 32, %s16, [#allocation3]
    $region5: #{tpu_custom_call.1} parent=1 // pred_fallthru
      _
    // Predicated region
    $region6: #{tpu_custom_call.1} parent=1 // pred_check
      _
    $region7: #{tpu_custom_call.1} parent=1 // pred_check_branch
      %20 = sbr.rel (0) target = $region9
    $region8: #{tpu_custom_call.1} parent=1 // pred_region
      _
    $region9: #{tpu_custom_call.1} parent=1 // pred_fallthru
      _
    // Predicated region
    $region10: #{tpu_custom_call.1} parent=1 // pred_check
      _
    $region11: #{tpu_custom_call.1} parent=1 // pred_check_branch
      %22 = sbr.rel (0) target = $region13
    $region12: #{tpu_custom_call.1} parent=1 // pred_region
      %23 = dma.done [#allocation3], 32
    $region13: #{tpu_custom_call.1} parent=1 // pred_fallthru
      _
    %vm24 = vcmask 48128
    %25 = vst.msk [vmem:[#allocation5] sm:$0xff] %vm24, 0
    %v26 = vld [vmem:[#allocation5] sm:$0x3]
    %v27 = vld [vmem:[#allocation2] sm:$0x3]
    %v28 = vld [vmem:[%s1] sm:$0x3]
    %vm29 = vcmp.eq.s32.totalorder %v27, %v28
    %vm30 = vcmp.ne.s32.totalorder %v28, 0
    %vm31 = vmand %vm29, %vm30
    %v32 = vsel %vm31, 1, 0
    %v33 = vadd.s32 %v26, %v32
    %vm34 = vcmask 41984
    %35 = vst.msk [vmem:[#allocation5] sm:$0x3] %vm34, %v33
    // Predicated region
    $region14: #{tpu_custom_call.1} parent=1 // pred_check
      _
    $region15: #{tpu_custom_call.1} parent=1 // pred_check_branch
      %37 = sbr.rel (0) target = $region17
    $region16: #{tpu_custom_call.1} parent=1 // pred_region
      %s39 = ssub.s32 128, 128
      %40 = vsyncadd [#allocation4], %s39
      %s42 = sshll.u32 [#allocation5], 4
      %s43 = int_to_ptr.vmem [resolvable:$true] %s42
      %45 = dma.vmem_to_hbm [thread:$0]  %s43, 128, %s2, [#allocation4]
    $region17: #{tpu_custom_call.1} parent=1 // pred_fallthru
      _
    // Predicated region
    $region18: #{tpu_custom_call.1} parent=1 // pred_check
      _
    $region19: #{tpu_custom_call.1} parent=1 // pred_check_branch
      %47 = sbr.rel (0) target = $region21
    $region20: #{tpu_custom_call.1} parent=1 // pred_region
      %48 = dma.done [#allocation4], 128
    $region21: #{tpu_custom_call.1} parent=1 // pred_fallthru
      _
    %49 = vsyncpa [#allocation3], 1
    %50 = vsyncpa [#allocation4], 1

</llo_original>
